<compile_context>
chip_gen: v5e
topology: v5e:2x2
jax: 0.10.0
libtpu: 0.0.40
codegen_flags: <defaults>
</compile_context>

<pallas_src>
import functools

import jax
import jax.numpy as jnp
from jax.experimental import pallas as pl
from jax.experimental.pallas import tpu as pltpu


def _round_up(x, m):
    return (x + m - 1) // m * m


_VMEM = pl.BlockSpec(memory_space=pltpu.MemorySpace.VMEM)


# --------------------------------------------------------------------------- #
# Stage 1: support1 = X_star @ gc1_w, built in two row slabs (no X_star copy). #
# --------------------------------------------------------------------------- #
def _stage1_kernel(nx_pad, y_ref, x_ref, fc1_w_ref, fc1_b_ref, gc1_w_ref,
                   s1_ref):
    # support1 rows for the X block:  X @ W_gc1   (bf16 in, f32 accumulate)
    s1_ref[0:nx_pad, :] = jnp.dot(
        x_ref[...], gc1_w_ref[...],
        preferred_element_type=jnp.float32).astype(jnp.bfloat16)
    # fc1: Y_new = Y_embedding @ W_fc1 + b_fc1  (bias add in f32)
    y_new = jnp.dot(y_ref[...], fc1_w_ref[...],
                    preferred_element_type=jnp.float32) + fc1_b_ref[...]
    # support1 rows for the Y_new block:  Y_new @ W_gc1
    s1_ref[nx_pad:, :] = jnp.dot(
        y_new.astype(jnp.bfloat16), gc1_w_ref[...],
        preferred_element_type=jnp.float32).astype(jnp.bfloat16)


# --------------------------------------------------------------------------- #
# Stage 2 (row-tiled): x_emb = relu(E_tile @ support1 + b1);                   #
#                      support2_tile = x_emb @ gc2_w                          #
# --------------------------------------------------------------------------- #
def _stage2_kernel(e_ref, s1_ref, gc1_b_ref, gc2_w_ref, xemb_ref, s2_ref):
    h = jnp.dot(e_ref[...], s1_ref[...],
                preferred_element_type=jnp.float32) + gc1_b_ref[...]
    h = jnp.maximum(h, 0.0)                     # relu in f32
    xemb_ref[...] = h                           # f32 output (module return)
    s2_ref[...] = jnp.dot(h.astype(jnp.bfloat16), gc2_w_ref[...],
                          preferred_element_type=jnp.float32).astype(
                              jnp.bfloat16)


# --------------------------------------------------------------------------- #
# Stage 3 (row-tiled): out = sigmoid(A_tile @ support2 + b2)                   #
# --------------------------------------------------------------------------- #
def _stage3_kernel(a_ref, s2_ref, gc2_b_ref, out_ref):
    o = jnp.dot(a_ref[...], s2_ref[...],
                preferred_element_type=jnp.float32) + gc2_b_ref[...]
    out_ref[...] = jax.nn.sigmoid(o)            # sigmoid in f32


def low_layer_forward(Y_embedding, X, E_tilde, A_tilde, params, *,
                      row_tile=256):
    """Fused Pallas forward. Returns (sigmoid(output), X_embedding)."""
    fc1_w, fc1_b, gc1_w, gc1_b, gc2_w, gc2_b = params
    nx, nfeat = X.shape
    ny, nhid_high = Y_embedding.shape
    n = nx + ny
    nhid_low = gc1_w.shape[1]
    nclass = gc2_w.shape[1]

    assert row_tile % 128 == 0, "row_tile must be a multiple of 128"

    # -- padded geometry: lane dims -> multiples of 128; X/Y row split -> 16. --
    nx_p = _round_up(nx, 16)                       # bf16 sublane packing
    n_p = _round_up(max(nx_p + ny, row_tile), row_tile)
    ny_p = n_p - nx_p
    nfeat_p = _round_up(nfeat, 128)
    nhid_high_p = _round_up(nhid_high, 128)
    nhid_low_p = _round_up(nhid_low, 128)
    nclass_p = _round_up(nclass, 128)
    grid_rows = n_p // row_tile

    f32, bf16 = jnp.float32, jnp.bfloat16

    def pad2(a, r, c, dtype):
        out = jnp.zeros((r, c), dtype)
        return out.at[:a.shape[0], :a.shape[1]].set(a.astype(dtype))

    # Matmul operands in bf16; biases stay f32 (added to f32 accumulators).
    x_p = pad2(X, nx_p, nfeat_p, bf16)
    y_p = pad2(Y_embedding, ny_p, nhid_high_p, bf16)
    fc1_w_p = pad2(fc1_w, nhid_high_p, nfeat_p, bf16)
    fc1_b_p = pad2(fc1_b, 1, nfeat_p, f32)
    gc1_w_p = pad2(gc1_w, nfeat_p, nhid_low_p, bf16)
    gc1_b_p = pad2(gc1_b, 1, nhid_low_p, f32)
    gc2_w_p = pad2(gc2_w, nhid_low_p, nclass_p, bf16)
    gc2_b_p = pad2(gc2_b, 1, nclass_p, f32)

    # E_tilde columns index X_star rows -> remap around the X-row padding gap.
    e_p = jnp.zeros((n_p, n_p), bf16)
    e_p = e_p.at[:n, :nx].set(E_tilde[:, :nx].astype(bf16))
    e_p = e_p.at[:n, nx_p:nx_p + ny].set(E_tilde[:, nx:].astype(bf16))
    # A_tilde columns index X_embedding rows (same order); just pad at the end.
    a_p = pad2(A_tilde, n_p, n_p, bf16)

    vmem_limit = 48 * 1024 * 1024   # safe on v5e/v6e (128 MiB) and v7x (64 MiB)

    # ---------------- stage 1: support1 (n_p, nhid_low_p) in bf16 ------------
    support1 = pl.pallas_call(
        functools.partial(_stage1_kernel, nx_p),
        out_shape=jax.ShapeDtypeStruct((n_p, nhid_low_p), bf16),
        in_specs=[_VMEM] * 5,
        out_specs=_VMEM,
        compiler_params=pltpu.CompilerParams(vmem_limit_bytes=vmem_limit),
        cost_estimate=pl.CostEstimate(
            flops=2 * ny_p * nhid_high_p * nfeat_p
                  + 2 * n_p * nfeat_p * nhid_low_p,
            transcendentals=0,
            bytes_accessed=2 * (ny_p * nhid_high_p + nx_p * nfeat_p
                                + nhid_high_p * nfeat_p
                                + nfeat_p * nhid_low_p
                                + n_p * nhid_low_p) + 4 * nfeat_p),
    )(y_p, x_p, fc1_w_p, fc1_b_p, gc1_w_p)

    # ------------- stage 2: row-tiled E_tilde propagation + gc2 support ------
    xemb_p, support2 = pl.pallas_call(
        _stage2_kernel,
        out_shape=(jax.ShapeDtypeStruct((n_p, nhid_low_p), f32),
                   jax.ShapeDtypeStruct((n_p, nclass_p), bf16)),
        grid=(grid_rows,),
        in_specs=[
            pl.BlockSpec((row_tile, n_p), lambda i: (i, 0)),        # E rows
            pl.BlockSpec((n_p, nhid_low_p), lambda i: (0, 0)),      # support1
            pl.BlockSpec((1, nhid_low_p), lambda i: (0, 0)),        # gc1_b
            pl.BlockSpec((nhid_low_p, nclass_p), lambda i: (0, 0)),  # gc2_w
        ],
        out_specs=(
            pl.BlockSpec((row_tile, nhid_low_p), lambda i: (i, 0)),
            pl.BlockSpec((row_tile, nclass_p), lambda i: (i, 0)),
        ),
        compiler_params=pltpu.CompilerParams(
            dimension_semantics=("parallel",),
            vmem_limit_bytes=vmem_limit),
        cost_estimate=pl.CostEstimate(
            flops=2 * n_p * n_p * nhid_low_p
                  + 2 * n_p * nhid_low_p * nclass_p,
            transcendentals=0,
            bytes_accessed=2 * n_p * n_p + 2 * n_p * nhid_low_p
                           + 2 * nhid_low_p * nclass_p + 4 * nhid_low_p
                           + 4 * n_p * nhid_low_p + 2 * n_p * nclass_p),
    )(e_p, support1, gc1_b_p, gc2_w_p)

    # ---------------- stage 3: row-tiled A_tilde propagation + sigmoid -------
    sig_p = pl.pallas_call(
        _stage3_kernel,
        out_shape=jax.ShapeDtypeStruct((n_p, nclass_p), f32),
        grid=(grid_rows,),
        in_specs=[
            pl.BlockSpec((row_tile, n_p), lambda i: (i, 0)),        # A rows
            pl.BlockSpec((n_p, nclass_p), lambda i: (0, 0)),        # support2
            pl.BlockSpec((1, nclass_p), lambda i: (0, 0)),          # gc2_b
        ],
        out_specs=pl.BlockSpec((row_tile, nclass_p), lambda i: (i, 0)),
        compiler_params=pltpu.CompilerParams(
            dimension_semantics=("parallel",),
            vmem_limit_bytes=vmem_limit),
        cost_estimate=pl.CostEstimate(
            flops=2 * n_p * n_p * nclass_p,
            transcendentals=n_p * nclass_p,
            bytes_accessed=2 * n_p * n_p + 2 * n_p * nclass_p
                           + 4 * nclass_p + 4 * n_p * nclass_p),
    )(a_p, support2, gc2_b_p)

    # Slice back to logical (unpadded) shapes.
    return sig_p[:n, :nclass], xemb_p[:n, :nhid_low]


def init_params(key, nfeat, nhid_lowlayer, nhid_highlayer, nclass):
    ks = jax.random.split(key, 6)
    scale = 0.1
    fc1_w = scale * jax.random.normal(ks[0], (nhid_highlayer, nfeat), jnp.float32)
    fc1_b = scale * jax.random.normal(ks[1], (1, nfeat), jnp.float32)
    gc1_w = scale * jax.random.normal(ks[2], (nfeat, nhid_lowlayer), jnp.float32)
    gc1_b = scale * jax.random.normal(ks[3], (1, nhid_lowlayer), jnp.float32)
    gc2_w = scale * jax.random.normal(ks[4], (nhid_lowlayer, nclass), jnp.float32)
    gc2_b = scale * jax.random.normal(ks[5], (1, nclass), jnp.float32)
    return fc1_w, fc1_b, gc1_w, gc1_b, gc2_w, gc2_b


def reference_forward(Y_embedding, X, E_tilde, A_tilde, params):
    fc1_w, fc1_b, gc1_w, gc1_b, gc2_w, gc2_b = params
    y_new = Y_embedding @ fc1_w + fc1_b
    x_star = jnp.concatenate([X, y_new], axis=0)
    x_emb = jax.nn.relu(E_tilde @ (x_star @ gc1_w) + gc1_b)
    out = A_tilde @ (x_emb @ gc2_w) + gc2_b
    return jax.nn.sigmoid(out), x_emb


if __name__ == "__main__":
    # Small shapes consistent with the module; nx deliberately NOT a multiple
    # of 16 so the X/Y row-split padding + E_tilde column remap is exercised,
    # and n chosen so the row-tiled grid has >1 step.
    nfeat, nhid_low, nhid_high, nclass = 16, 32, 32, 8
    nx, ny = 230, 24
    n = nx + ny

    key = jax.random.PRNGKey(0)
    k_y, k_x, k_e, k_a, k_p = jax.random.split(key, 5)

    Y_embedding = jax.random.normal(k_y, (ny, nhid_high), jnp.float32)
    X = jax.random.normal(k_x, (nx, nfeat), jnp.float32)
    E_tilde = jax.random.uniform(k_e, (n, n), jnp.float32) / n
    A_tilde = jax.random.uniform(k_a, (n, n), jnp.float32) / n

    params = init_params(k_p, nfeat, nhid_low, nhid_high, nclass)

    sig_out, x_emb = low_layer_forward(Y_embedding, X, E_tilde, A_tilde, params,
                                       row_tile=128)
    jax.block_until_ready((sig_out, x_emb))

    ref_sig, ref_emb = reference_forward(Y_embedding, X, E_tilde, A_tilde, params)
    assert sig_out.shape == (n, nclass) and x_emb.shape == (n, nhid_low)
    # bf16 matmul operands with f32 accumulation -> ~1e-3 level error vs f32 ref.
    assert jnp.allclose(sig_out, ref_sig, atol=2e-2, rtol=2e-2), \
        float(jnp.max(jnp.abs(sig_out - ref_sig)))
    assert jnp.allclose(x_emb, ref_emb, atol=2e-2, rtol=2e-2), \
        float(jnp.max(jnp.abs(x_emb - ref_emb)))

    print("KERNEL_OK")
</pallas_src>

<mosaic_0001>
module attributes {stable_mosaic.version = 11 : i64} {
  func.func @_stage1_kernel(%arg0: memref<144x128xbf16, #tpu.memory_space<vmem>>, %arg1: memref<240x128xbf16, #tpu.memory_space<vmem>>, %arg2: memref<128x128xbf16, #tpu.memory_space<vmem>>, %arg3: memref<1x128xf32, #tpu.memory_space<vmem>>, %arg4: memref<128x128xbf16, #tpu.memory_space<vmem>>, %arg5: memref<384x128xbf16, #tpu.memory_space<vmem>>) attributes {dimension_semantics = [], scalar_prefetch = 0 : i64, scratch_operands = 0 : i64, tpu.core_type = #tpu.core_type<tc>} {
    %c0 = arith.constant 0 : index
    %c0_0 = arith.constant 0 : index
    %0 = vector.load %arg1[%c0, %c0_0] : memref<240x128xbf16, #tpu.memory_space<vmem>>, vector<240x128xbf16>
    %c0_1 = arith.constant 0 : index
    %c0_2 = arith.constant 0 : index
    %1 = vector.load %arg4[%c0_1, %c0_2] : memref<128x128xbf16, #tpu.memory_space<vmem>>, vector<128x128xbf16>
    %cst = arith.constant dense<0.000000e+00> : vector<240x128xf32>
    %2 = tpu.matmul %0, %1, %cst {dimension_numbers = #tpu.dot_dimension_numbers<[1], [0], [0], [1], [0, 0, 1, 1], [], []>} : vector<240x128xbf16>, vector<128x128xbf16>, vector<240x128xf32> -> vector<240x128xf32>
    %3 = arith.truncf %2 : vector<240x128xf32> to vector<240x128xbf16>
    %c0_3 = arith.constant 0 : index
    %c0_4 = arith.constant 0 : index
    %4 = vector.load %arg5[%c0_3, %c0_4] : memref<384x128xbf16, #tpu.memory_space<vmem>>, vector<240x128xbf16>
    tpu.vector_store %arg5[%c0_3, %c0_4], %3 {strides = array<i32>} : memref<384x128xbf16, #tpu.memory_space<vmem>>, vector<240x128xbf16>,
    %c0_5 = arith.constant 0 : index
    %c0_6 = arith.constant 0 : index
    %5 = vector.load %arg0[%c0_5, %c0_6] : memref<144x128xbf16, #tpu.memory_space<vmem>>, vector<144x128xbf16>
    %c0_7 = arith.constant 0 : index
    %c0_8 = arith.constant 0 : index
    %6 = vector.load %arg2[%c0_7, %c0_8] : memref<128x128xbf16, #tpu.memory_space<vmem>>, vector<128x128xbf16>
    %cst_9 = arith.constant dense<0.000000e+00> : vector<144x128xf32>
    %7 = tpu.matmul %5, %6, %cst_9 {dimension_numbers = #tpu.dot_dimension_numbers<[1], [0], [0], [1], [0, 0, 1, 1], [], []>} : vector<144x128xbf16>, vector<128x128xbf16>, vector<144x128xf32> -> vector<144x128xf32>
    %c0_10 = arith.constant 0 : index
    %c0_11 = arith.constant 0 : index
    %8 = vector.load %arg3[%c0_10, %c0_11] : memref<1x128xf32, #tpu.memory_space<vmem>>, vector<1x128xf32>
    %9 = vector.broadcast %8 : vector<1x128xf32> to vector<144x128xf32>
    %10 = arith.addf %7, %9 : vector<144x128xf32>
    %11 = arith.truncf %10 : vector<144x128xf32> to vector<144x128xbf16>
    %c0_12 = arith.constant 0 : index
    %c0_13 = arith.constant 0 : index
    %12 = vector.load %arg4[%c0_12, %c0_13] : memref<128x128xbf16, #tpu.memory_space<vmem>>, vector<128x128xbf16>
    %cst_14 = arith.constant dense<0.000000e+00> : vector<144x128xf32>
    %13 = tpu.matmul %11, %12, %cst_14 {dimension_numbers = #tpu.dot_dimension_numbers<[1], [0], [0], [1], [0, 0, 1, 1], [], []>} : vector<144x128xbf16>, vector<128x128xbf16>, vector<144x128xf32> -> vector<144x128xf32>
    %14 = arith.truncf %13 : vector<144x128xf32> to vector<144x128xbf16>
    %c240 = arith.constant 240 : index
    %c0_15 = arith.constant 0 : index
    %15 = vector.load %arg5[%c240, %c0_15] : memref<384x128xbf16, #tpu.memory_space<vmem>>, vector<144x128xbf16>
    tpu.vector_store %arg5[%c240, %c0_15], %14 {strides = array<i32>} : memref<384x128xbf16, #tpu.memory_space<vmem>>, vector<144x128xbf16>,
    return
  }
}

</mosaic_0001>

<llo_original>
// kernel: tpu_custom_call.1
$region0: #{tpu_custom_call.1}
  #allocation0 [shape = 'u32[]', space=smem, size = 0x4, offset = 0x4, fixed_abs, tag = 'smem constant byte address 0x4 - core index']
  #allocation1 [shape = 'u32[72,128]{1,0:T(1,128)}', space=vmem, size = 0x9000, scoped, tag = 'internal scratch']
  %s0 = inlined_call_operand.hbm [shape: bf16[144,128], index: 0, kind: input, shape index: {}]
  %s1 = inlined_call_operand.hbm [shape: bf16[240,128], index: 1, kind: input, shape index: {}]
  %s2 = inlined_call_operand.hbm [shape: bf16[128,128], index: 2, kind: input, shape index: {}]
  %s3 = inlined_call_operand.vmem [shape: f32[1,128], index: 3, kind: input, shape index: {}]
  %s4 = inlined_call_operand.hbm [shape: bf16[128,128], index: 4, kind: input, shape index: {}]
  %s5 = inlined_call_operand.hbm [shape: bf16[384,128], index: 5, kind: output, shape index: {}]
  %s6 = sld [smem:[#allocation0]]
  $region46: #{tpu_custom_call.1} parent=0
    _
  %s8 = ssub.s32 1, %s6
  %s9 = scalar_select 0, %s8, %s6
  $region1: #{tpu_custom_call.1} parent=0
    #allocation2 [shape = 'u8[36864]{0}', space=vmem, size = 0x9000, scoped, tag = 'input window, operand 0, single buffered']
    #allocation3 [shape = 's32[1]{0}', space=sflag, size = 0x4, scoped, tag = 'scoped memory for tpu_custom_call.1']
    #allocation4 [shape = 's32[1]{0}', space=sflag, size = 0x4, scoped, tag = 'scoped memory for tpu_custom_call.1']
    #allocation5 [shape = 'u8[61440]{0}', space=vmem, size = 0xf000, scoped, tag = 'input window, operand 1, single buffered']
    #allocation6 [shape = 's32[1]{0}', space=sflag, size = 0x4, scoped, tag = 'scoped memory for tpu_custom_call.1']
    #allocation7 [shape = 'u8[32768]{0}', space=vmem, size = 0x8000, scoped, tag = 'input window, operand 2, single buffered']
    #allocation8 [shape = 'u8[32768]{0}', space=vmem, size = 0x8000, scoped, tag = 'input window, operand 4, single buffered']
    #allocation9 [shape = 's32[1]{0}', space=sflag, size = 0x4, scoped, tag = 'scoped memory for tpu_custom_call.1']
    #allocation10 [shape = 'u8[98304]{0}', space=vmem, size = 0x18000, scoped, tag = 'output window, operand 0, single buffered']
    %10 = vsyncpa [#allocation3], 0
    %11 = vsyncpa [#allocation6], 0
    %12 = vsyncpa [#allocation9], 0
    %13 = vsyncpa [#allocation4], 0
    // Predicated region
    $region2: #{tpu_custom_call.1} parent=1 // pred_check
      _
    $region3: #{tpu_custom_call.1} parent=1 // pred_check_branch
      %15 = sbr.rel (0) target = $region5
    $region4: #{tpu_custom_call.1} parent=1 // pred_region
      %17 = vsyncadd [#allocation3], 0
      %s18 = sshll.u32 %s0, 4
      %s19 = int_to_ptr.hbm [resolvable:$true] %s18
      %s20 = sshll.u32 [#allocation2], 4
      %s21 = int_to_ptr.vmem [resolvable:$true] %s20
      %26 = dma.hbm_to_vmem [thread:$0]  %s19, 1152, %s21, [#allocation3], 64, 64, 4
    $region5: #{tpu_custom_call.1} parent=1 // pred_fallthru
      _
    // Predicated region
    $region6: #{tpu_custom_call.1} parent=1 // pred_check
      _
    $region7: #{tpu_custom_call.1} parent=1 // pred_check_branch
      %28 = sbr.rel (0) target = $region9
    $region8: #{tpu_custom_call.1} parent=1 // pred_region
      %30 = vsyncadd [#allocation6], 0
      %s31 = sshll.u32 %s1, 4
      %s32 = int_to_ptr.hbm [resolvable:$true] %s31
      %s33 = sshll.u32 [#allocation5], 4
      %s34 = int_to_ptr.vmem [resolvable:$true] %s33
      %39 = dma.hbm_to_vmem [thread:$0]  %s32, 1920, %s34, [#allocation6], 64, 64, 4
    $region9: #{tpu_custom_call.1} parent=1 // pred_fallthru
      _
    // Predicated region
    $region10: #{tpu_custom_call.1} parent=1 // pred_check
      _
    $region11: #{tpu_custom_call.1} parent=1 // pred_check_branch
      %41 = sbr.rel (0) target = $region13
    $region12: #{tpu_custom_call.1} parent=1 // pred_region
      %43 = vsyncadd [#allocation6], 0
      %s44 = sshll.u32 %s2, 4
      %s45 = int_to_ptr.hbm [resolvable:$true] %s44
      %s46 = sshll.u32 [#allocation7], 4
      %s47 = int_to_ptr.vmem [resolvable:$true] %s46
      %52 = dma.hbm_to_vmem [thread:$0]  %s45, 1024, %s47, [#allocation6], 64, 64, 4
    $region13: #{tpu_custom_call.1} parent=1 // pred_fallthru
      _
    // Predicated region
    $region14: #{tpu_custom_call.1} parent=1 // pred_check
      _
    $region15: #{tpu_custom_call.1} parent=1 // pred_check_branch
      %54 = sbr.rel (0) target = $region17
    $region16: #{tpu_custom_call.1} parent=1 // pred_region
      _
    $region17: #{tpu_custom_call.1} parent=1 // pred_fallthru
      _
    // Predicated region
    $region18: #{tpu_custom_call.1} parent=1 // pred_check
      _
    $region19: #{tpu_custom_call.1} parent=1 // pred_check_branch
      %56 = sbr.rel (0) target = $region21
    $region20: #{tpu_custom_call.1} parent=1 // pred_region
      %58 = vsyncadd [#allocation9], 0
      %s59 = sshll.u32 %s4, 4
      %s60 = int_to_ptr.hbm [resolvable:$true] %s59
      %s61 = sshll.u32 [#allocation8], 4
      %s62 = int_to_ptr.vmem [resolvable:$true] %s61
      %67 = dma.hbm_to_vmem [thread:$0]  %s60, 1024, %s62, [#allocation9], 64, 64, 4
    $region21: #{tpu_custom_call.1} parent=1 // pred_fallthru
      _
    // Predicated region
    $region22: #{tpu_custom_call.1} parent=1 // pred_check
      _
    $region23: #{tpu_custom_call.1} parent=1 // pred_check_branch
      %69 = sbr.rel (0) target = $region25
    $region24: #{tpu_custom_call.1} parent=1 // pred_region
      %71 = dma.done [#allocation3], 1152
    $region25: #{tpu_custom_call.1} parent=1 // pred_fallthru
      _
    // Predicated region
    $region26: #{tpu_custom_call.1} parent=1 // pred_check
      _
    $region27: #{tpu_custom_call.1} parent=1 // pred_check_branch
      %73 = sbr.rel (0) target = $region29
    $region28: #{tpu_custom_call.1} parent=1 // pred_region
      %75 = dma.done [#allocation6], 1920
    $region29: #{tpu_custom_call.1} parent=1 // pred_fallthru
      _
    // Predicated region
    $region30: #{tpu_custom_call.1} parent=1 // pred_check
      _
    $region31: #{tpu_custom_call.1} parent=1 // pred_check_branch
      %77 = sbr.rel (0) target = $region33
    $region32: #{tpu_custom_call.1} parent=1 // pred_region
      %79 = dma.done [#allocation6], 1024
    $region33: #{tpu_custom_call.1} parent=1 // pred_fallthru
      _
    // Predicated region
    $region34: #{tpu_custom_call.1} parent=1 // pred_check
      _
    $region35: #{tpu_custom_call.1} parent=1 // pred_check_branch
      %81 = sbr.rel (0) target = $region37
    $region36: #{tpu_custom_call.1} parent=1 // pred_region
      %83 = dma.done [#allocation9], 1024
    $region37: #{tpu_custom_call.1} parent=1 // pred_fallthru
      _
    %v84 = vld [vmem:[#allocation5] sm:$0xf]
    %v85 = vld [vmem:[#allocation5 + $0x4] sm:$0xf]
    %v86 = vld [vmem:[#allocation5 + $0x8] sm:$0xf]
    %v87 = vld [vmem:[#allocation5 + $0xc] sm:$0xf]
    %v88 = vld [vmem:[#allocation5 + $0x10] sm:$0xf]
    %v89 = vld [vmem:[#allocation5 + $0x14] sm:$0xf]
    %v90 = vld [vmem:[#allocation5 + $0x18] sm:$0xf]
    %v91 = vld [vmem:[#allocation5 + $0x1c] sm:$0xf]
    %v92 = vld [vmem:[#allocation5 + $0x20] sm:$0xf]
    %v93 = vld [vmem:[#allocation5 + $0x24] sm:$0xf]
    %v94 = vld [vmem:[#allocation5 + $0x28] sm:$0xf]
    %v95 = vld [vmem:[#allocation5 + $0x2c] sm:$0xf]
    %v96 = vld [vmem:[#allocation5 + $0x30] sm:$0xf]
    %v97 = vld [vmem:[#allocation5 + $0x34] sm:$0xf]
    %v98 = vld [vmem:[#allocation5 + $0x38] sm:$0xf]
    %v99 = vld [vmem:[#allocation5 + $0x3c] sm:$0xf]
    %v100 = vld [vmem:[#allocation5 + $0x40] sm:$0xf]
    %v101 = vld [vmem:[#allocation5 + $0x44] sm:$0xf]
    %v102 = vld [vmem:[#allocation5 + $0x48] sm:$0xf]
    %v103 = vld [vmem:[#allocation5 + $0x4c] sm:$0xf]
    %v104 = vld [vmem:[#allocation5 + $0x50] sm:$0xf]
    %v105 = vld [vmem:[#allocation5 + $0x54] sm:$0xf]
    %v106 = vld [vmem:[#allocation5 + $0x58] sm:$0xf]
    %v107 = vld [vmem:[#allocation5 + $0x5c] sm:$0xf]
    %v108 = vld [vmem:[#allocation5 + $0x60] sm:$0xf]
    %v109 = vld [vmem:[#allocation5 + $0x64] sm:$0xf]
    %v110 = vld [vmem:[#allocation5 + $0x68] sm:$0xf]
    %v111 = vld [vmem:[#allocation5 + $0x6c] sm:$0xf]
    %v112 = vld [vmem:[#allocation5 + $0x70] sm:$0xf]
    %v113 = vld [vmem:[#allocation5 + $0x74] sm:$0xf]
    %v114 = vld [vmem:[#allocation8] sm:$0xf]
    %v115 = vld [vmem:[#allocation8 + $0x4] sm:$0xf]
    %v116 = vld [vmem:[#allocation8 + $0x8] sm:$0xf]
    %v117 = vld [vmem:[#allocation8 + $0xc] sm:$0xf]
    %v118 = vld [vmem:[#allocation8 + $0x10] sm:$0xf]
    %v119 = vld [vmem:[#allocation8 + $0x14] sm:$0xf]
    %v120 = vld [vmem:[#allocation8 + $0x18] sm:$0xf]
    %v121 = vld [vmem:[#allocation8 + $0x1c] sm:$0xf]
    %v122 = vld [vmem:[#allocation8 + $0x20] sm:$0xf]
    %v123 = vld [vmem:[#allocation8 + $0x24] sm:$0xf]
    %v124 = vld [vmem:[#allocation8 + $0x28] sm:$0xf]
    %v125 = vld [vmem:[#allocation8 + $0x2c] sm:$0xf]
    %v126 = vld [vmem:[#allocation8 + $0x30] sm:$0xf]
    %v127 = vld [vmem:[#allocation8 + $0x34] sm:$0xf]
    %v128 = vld [vmem:[#allocation8 + $0x38] sm:$0xf]
    %v129 = vld [vmem:[#allocation8 + $0x3c] sm:$0xf]
    %v160 = vunpack.c.l.b16 %v84
    %v161 = vunpack.c.l.b16 %v85
    %v162 = vunpack.c.l.b16 %v86
    %v163 = vunpack.c.l.b16 %v87
    %v164 = vunpack.c.l.b16 %v88
    %v165 = vunpack.c.l.b16 %v89
    %v166 = vunpack.c.l.b16 %v90
    %v167 = vunpack.c.l.b16 %v91
    %v168 = vunpack.c.l.b16 %v92
    %v169 = vunpack.c.l.b16 %v93
    %v170 = vunpack.c.l.b16 %v94
    %v171 = vunpack.c.l.b16 %v95
    %v172 = vunpack.c.l.b16 %v96
    %v173 = vunpack.c.l.b16 %v97
    %v174 = vunpack.c.l.b16 %v98
    %v175 = vunpack.c.l.b16 %v99
    %v176 = vunpack.c.l.b16 %v100
    %v177 = vunpack.c.l.b16 %v101
    %v178 = vunpack.c.l.b16 %v102
    %v179 = vunpack.c.l.b16 %v103
    %v180 = vunpack.c.l.b16 %v104
    %v181 = vunpack.c.l.b16 %v105
    %v182 = vunpack.c.l.b16 %v106
    %v183 = vunpack.c.l.b16 %v107
    %v184 = vunpack.c.l.b16 %v108
    %v185 = vunpack.c.l.b16 %v109
    %v186 = vunpack.c.l.b16 %v110
    %v187 = vunpack.c.l.b16 %v111
    %v188 = vunpack.c.l.b16 %v112
    %v189 = vunpack.c.l.b16 %v113
    %v190 = vpack.c.b16 %v161, %v160
    %v191 = vpack.c.b16 %v163, %v162
    %v192 = vpack.c.b16 %v165, %v164
    %v193 = vpack.c.b16 %v167, %v166
    %v194 = vpack.c.b16 %v169, %v168
    %v195 = vpack.c.b16 %v171, %v170
    %v196 = vpack.c.b16 %v173, %v172
    %v197 = vpack.c.b16 %v175, %v174
    %v198 = vpack.c.b16 %v177, %v176
    %v199 = vpack.c.b16 %v179, %v178
    %v200 = vpack.c.b16 %v181, %v180
    %v201 = vpack.c.b16 %v183, %v182
    %v202 = vpack.c.b16 %v185, %v184
    %v203 = vpack.c.b16 %v187, %v186
    %v204 = vpack.c.b16 %v189, %v188
    %v236 = vunpack.c.l.b16 %v114
    %v237 = vunpack.c.l.b16 %v115
    %v238 = vunpack.c.l.b16 %v116
    %v239 = vunpack.c.l.b16 %v117
    %v240 = vunpack.c.l.b16 %v118
    %v241 = vunpack.c.l.b16 %v119
    %v242 = vunpack.c.l.b16 %v120
    %v243 = vunpack.c.l.b16 %v121
    %v244 = vunpack.c.l.b16 %v122
    %v245 = vunpack.c.l.b16 %v123
    %v246 = vunpack.c.l.b16 %v124
    %v247 = vunpack.c.l.b16 %v125
    %v248 = vunpack.c.l.b16 %v126
    %v249 = vunpack.c.l.b16 %v127
    %v250 = vunpack.c.l.b16 %v128
    %v251 = vunpack.c.l.b16 %v129
    %v252 = vpack.c.b16 %v237, %v236
    %v253 = vpack.c.b16 %v239, %v238
    %v254 = vpack.c.b16 %v241, %v240
    %v255 = vpack.c.b16 %v243, %v242
    %v256 = vpack.c.b16 %v245, %v244
    %v257 = vpack.c.b16 %v247, %v246
    %v258 = vpack.c.b16 %v249, %v248
    %v259 = vpack.c.b16 %v251, %v250
    %268 = vmatpush.bf16.msra.mxu0 %v259
    %269 = vmatpush.bf16.msra.mxu0 %v258
    %270 = vmatpush.bf16.msra.mxu0 %v257
    %271 = vmatpush.bf16.msra.mxu0 %v256
    %272 = vmatpush.bf16.msra.mxu0 %v255
    %273 = vmatpush.bf16.msra.mxu0 %v254
    %274 = vmatpush.bf16.msra.mxu0 %v253
    %275 = vmatpush.bf16.msra.mxu0 %v252
    %276 = vmatmul.bf16.gmra.mxu0 %v190
    %v277 = vpop.f32.mrf.mxu0
    %v278 = vadd.f32 0.0, %v277
    %v279 = vpop.f32.mrf.mxu0
    %v280 = vadd.f32 0.0, %v279
    %281 = vmatmul.bf16.gmra.mxu0 %v191
    %v282 = vpop.f32.mrf.mxu0
    %v283 = vadd.f32 0.0, %v282
    %v284 = vpop.f32.mrf.mxu0
    %v285 = vadd.f32 0.0, %v284
    %286 = vmatmul.bf16.gmra.mxu0 %v192
    %v287 = vpop.f32.mrf.mxu0
    %v288 = vadd.f32 0.0, %v287
    %v289 = vpop.f32.mrf.mxu0
    %v290 = vadd.f32 0.0, %v289
    %291 = vmatmul.bf16.gmra.mxu0 %v193
    %v292 = vpop.f32.mrf.mxu0
    %v293 = vadd.f32 0.0, %v292
    %v294 = vpop.f32.mrf.mxu0
    %v295 = vadd.f32 0.0, %v294
    %296 = vmatmul.bf16.gmra.mxu0 %v194
    %v297 = vpop.f32.mrf.mxu0
    %v298 = vadd.f32 0.0, %v297
    %v299 = vpop.f32.mrf.mxu0
    %v300 = vadd.f32 0.0, %v299
    %301 = vmatmul.bf16.gmra.mxu0 %v195
    %v302 = vpop.f32.mrf.mxu0
    %v303 = vadd.f32 0.0, %v302
    %v304 = vpop.f32.mrf.mxu0
    %v305 = vadd.f32 0.0, %v304
    %306 = vmatmul.bf16.gmra.mxu0 %v196
    %v307 = vpop.f32.mrf.mxu0
    %v308 = vadd.f32 0.0, %v307
    %v309 = vpop.f32.mrf.mxu0
    %v310 = vadd.f32 0.0, %v309
    %311 = vmatmul.bf16.gmra.mxu0 %v197
    %v312 = vpop.f32.mrf.mxu0
    %v313 = vadd.f32 0.0, %v312
    %v314 = vpop.f32.mrf.mxu0
    %v315 = vadd.f32 0.0, %v314
    %316 = vmatmul.bf16.gmra.mxu0 %v198
    %v317 = vpop.f32.mrf.mxu0
    %v318 = vadd.f32 0.0, %v317
    %v319 = vpop.f32.mrf.mxu0
    %v320 = vadd.f32 0.0, %v319
    %321 = vmatmul.bf16.gmra.mxu0 %v199
    %v322 = vpop.f32.mrf.mxu0
    %v323 = vadd.f32 0.0, %v322
    %v324 = vpop.f32.mrf.mxu0
    %v325 = vadd.f32 0.0, %v324
    %326 = vmatmul.bf16.gmra.mxu0 %v200
    %v327 = vpop.f32.mrf.mxu0
    %v328 = vadd.f32 0.0, %v327
    %v329 = vpop.f32.mrf.mxu0
    %v330 = vadd.f32 0.0, %v329
    %331 = vmatmul.bf16.gmra.mxu0 %v201
    %v332 = vpop.f32.mrf.mxu0
    %v333 = vadd.f32 0.0, %v332
    %v334 = vpop.f32.mrf.mxu0
    %v335 = vadd.f32 0.0, %v334
    %336 = vmatmul.bf16.gmra.mxu0 %v202
    %v337 = vpop.f32.mrf.mxu0
    %v338 = vadd.f32 0.0, %v337
    %v339 = vpop.f32.mrf.mxu0
    %v340 = vadd.f32 0.0, %v339
    %341 = vmatmul.bf16.gmra.mxu0 %v203
    %v342 = vpop.f32.mrf.mxu0
    %v343 = vadd.f32 0.0, %v342
    %v344 = vpop.f32.mrf.mxu0
    %v345 = vadd.f32 0.0, %v344
    %346 = vmatmul.bf16.gmra.mxu0 %v204
    %v347 = vpop.f32.mrf.mxu0
    %v348 = vadd.f32 0.0, %v347
    %v349 = vpop.f32.mrf.mxu0
    %v350 = vadd.f32 0.0, %v349
    %351 = vdwg.mxu0
    %v352 = vpack.c.bf16 %v278, %v278
    %v353 = vpack.c.bf16 %v280, %v280
    %v354 = vpack.c.bf16 %v283, %v283
    %v355 = vpack.c.bf16 %v285, %v285
    %v356 = vpack.c.bf16 %v288, %v288
    %v357 = vpack.c.bf16 %v290, %v290
    %v358 = vpack.c.bf16 %v293, %v293
    %v359 = vpack.c.bf16 %v295, %v295
    %v360 = vpack.c.bf16 %v298, %v298
    %v361 = vpack.c.bf16 %v300, %v300
    %v362 = vpack.c.bf16 %v303, %v303
    %v363 = vpack.c.bf16 %v305, %v305
    %v364 = vpack.c.bf16 %v308, %v308
    %v365 = vpack.c.bf16 %v310, %v310
    %v366 = vpack.c.bf16 %v313, %v313
    %v367 = vpack.c.bf16 %v315, %v315
    %v368 = vpack.c.bf16 %v318, %v318
    %v369 = vpack.c.bf16 %v320, %v320
    %v370 = vpack.c.bf16 %v323, %v323
    %v371 = vpack.c.bf16 %v325, %v325
    %v372 = vpack.c.bf16 %v328, %v328
    %v373 = vpack.c.bf16 %v330, %v330
    %v374 = vpack.c.bf16 %v333, %v333
    %v375 = vpack.c.bf16 %v335, %v335
    %v376 = vpack.c.bf16 %v338, %v338
    %v377 = vpack.c.bf16 %v340, %v340
    %v378 = vpack.c.bf16 %v343, %v343
    %v379 = vpack.c.bf16 %v345, %v345
    %v380 = vpack.c.bf16 %v348, %v348
    %v381 = vpack.c.bf16 %v350, %v350
    %382 = vst [vmem:[#allocation10] sm:$0xf] %v352
    %383 = vst [vmem:[#allocation10 + $0x4] sm:$0xf] %v353
    %384 = vst [vmem:[#allocation10 + $0x8] sm:$0xf] %v354
    %385 = vst [vmem:[#allocation10 + $0xc] sm:$0xf] %v355
    %386 = vst [vmem:[#allocation10 + $0x10] sm:$0xf] %v356
    %387 = vst [vmem:[#allocation10 + $0x14] sm:$0xf] %v357
    %388 = vst [vmem:[#allocation10 + $0x18] sm:$0xf] %v358
    %389 = vst [vmem:[#allocation10 + $0x1c] sm:$0xf] %v359
    %390 = vst [vmem:[#allocation10 + $0x20] sm:$0xf] %v360
    %391 = vst [vmem:[#allocation10 + $0x24] sm:$0xf] %v361
    %392 = vst [vmem:[#allocation10 + $0x28] sm:$0xf] %v362
    %393 = vst [vmem:[#allocation10 + $0x2c] sm:$0xf] %v363
    %394 = vst [vmem:[#allocation10 + $0x30] sm:$0xf] %v364
    %395 = vst [vmem:[#allocation10 + $0x34] sm:$0xf] %v365
    %396 = vst [vmem:[#allocation10 + $0x38] sm:$0xf] %v366
    %397 = vst [vmem:[#allocation10 + $0x3c] sm:$0xf] %v367
    %398 = vst [vmem:[#allocation10 + $0x40] sm:$0xf] %v368
    %399 = vst [vmem:[#allocation10 + $0x44] sm:$0xf] %v369
    %400 = vst [vmem:[#allocation10 + $0x48] sm:$0xf] %v370
    %401 = vst [vmem:[#allocation10 + $0x4c] sm:$0xf] %v371
    %402 = vst [vmem:[#allocation10 + $0x50] sm:$0xf] %v372
    %403 = vst [vmem:[#allocation10 + $0x54] sm:$0xf] %v373
    %404 = vst [vmem:[#allocation10 + $0x58] sm:$0xf] %v374
    %405 = vst [vmem:[#allocation10 + $0x5c] sm:$0xf] %v375
    %406 = vst [vmem:[#allocation10 + $0x60] sm:$0xf] %v376
    %407 = vst [vmem:[#allocation10 + $0x64] sm:$0xf] %v377
    %408 = vst [vmem:[#allocation10 + $0x68] sm:$0xf] %v378
    %409 = vst [vmem:[#allocation10 + $0x6c] sm:$0xf] %v379
    %410 = vst [vmem:[#allocation10 + $0x70] sm:$0xf] %v380
    %411 = vst [vmem:[#allocation10 + $0x74] sm:$0xf] %v381
    %v412 = vld [vmem:[#allocation2] sm:$0xf]
    %v413 = vld [vmem:[#allocation2 + $0x4] sm:$0xf]
    %v414 = vld [vmem:[#allocation2 + $0x8] sm:$0xf]
    %v415 = vld [vmem:[#allocation2 + $0xc] sm:$0xf]
    %v416 = vld [vmem:[#allocation2 + $0x10] sm:$0xf]
    %v417 = vld [vmem:[#allocation2 + $0x14] sm:$0xf]
    %v418 = vld [vmem:[#allocation2 + $0x18] sm:$0xf]
    %v419 = vld [vmem:[#allocation2 + $0x1c] sm:$0xf]
    %v420 = vld [vmem:[#allocation2 + $0x20] sm:$0xf]
    %v421 = vld [vmem:[#allocation2 + $0x24] sm:$0xf]
    %v422 = vld [vmem:[#allocation2 + $0x28] sm:$0xf]
    %v423 = vld [vmem:[#allocation2 + $0x2c] sm:$0xf]
    %v424 = vld [vmem:[#allocation2 + $0x30] sm:$0xf]
    %v425 = vld [vmem:[#allocation2 + $0x34] sm:$0xf]
    %v426 = vld [vmem:[#allocation2 + $0x38] sm:$0xf]
    %v427 = vld [vmem:[#allocation2 + $0x3c] sm:$0xf]
    %v428 = vld [vmem:[#allocation2 + $0x40] sm:$0xf]
    %v429 = vld [vmem:[#allocation2 + $0x44] sm:$0xf]
    %v430 = vld [vmem:[#allocation7] sm:$0xf]
    %v431 = vld [vmem:[#allocation7 + $0x4] sm:$0xf]
    %v432 = vld [vmem:[#allocation7 + $0x8] sm:$0xf]
    %v433 = vld [vmem:[#allocation7 + $0xc] sm:$0xf]
    %v434 = vld [vmem:[#allocation7 + $0x10] sm:$0xf]
    %v435 = vld [vmem:[#allocation7 + $0x14] sm:$0xf]
    %v436 = vld [vmem:[#allocation7 + $0x18] sm:$0xf]
    %v437 = vld [vmem:[#allocation7 + $0x1c] sm:$0xf]
    %v438 = vld [vmem:[#allocation7 + $0x20] sm:$0xf]
    %v439 = vld [vmem:[#allocation7 + $0x24] sm:$0xf]
    %v440 = vld [vmem:[#allocation7 + $0x28] sm:$0xf]
    %v441 = vld [vmem:[#allocation7 + $0x2c] sm:$0xf]
    %v442 = vld [vmem:[#allocation7 + $0x30] sm:$0xf]
    %v443 = vld [vmem:[#allocation7 + $0x34] sm:$0xf]
    %v444 = vld [vmem:[#allocation7 + $0x38] sm:$0xf]
    %v445 = vld [vmem:[#allocation7 + $0x3c] sm:$0xf]
    %v446 = vld [vmem:[%s3] sm:$0x1]
    %v448 = vperm.slane %v446, 0
    %v468 = vunpack.c.l.b16 %v412
    %v469 = vunpack.c.l.b16 %v413
    %v470 = vunpack.c.l.b16 %v414
    %v471 = vunpack.c.l.b16 %v415
    %v472 = vunpack.c.l.b16 %v416
    %v473 = vunpack.c.l.b16 %v417
    %v474 = vunpack.c.l.b16 %v418
    %v475 = vunpack.c.l.b16 %v419
    %v476 = vunpack.c.l.b16 %v420
    %v477 = vunpack.c.l.b16 %v421
    %v478 = vunpack.c.l.b16 %v422
    %v479 = vunpack.c.l.b16 %v423
    %v480 = vunpack.c.l.b16 %v424
    %v481 = vunpack.c.l.b16 %v425
    %v482 = vunpack.c.l.b16 %v426
    %v483 = vunpack.c.l.b16 %v427
    %v484 = vunpack.c.l.b16 %v428
    %v485 = vunpack.c.l.b16 %v429
    %v486 = vpack.c.b16 %v469, %v468
    %v487 = vpack.c.b16 %v471, %v470
    %v488 = vpack.c.b16 %v473, %v472
    %v489 = vpack.c.b16 %v475, %v474
    %v490 = vpack.c.b16 %v477, %v476
    %v491 = vpack.c.b16 %v479, %v478
    %v492 = vpack.c.b16 %v481, %v480
    %v493 = vpack.c.b16 %v483, %v482
    %v494 = vpack.c.b16 %v485, %v484
    %v520 = vunpack.c.l.b16 %v430
    %v521 = vunpack.c.l.b16 %v431
    %v522 = vunpack.c.l.b16 %v432
    %v523 = vunpack.c.l.b16 %v433
    %v524 = vunpack.c.l.b16 %v434
    %v525 = vunpack.c.l.b16 %v435
    %v526 = vunpack.c.l.b16 %v436
    %v527 = vunpack.c.l.b16 %v437
    %v528 = vunpack.c.l.b16 %v438
    %v529 = vunpack.c.l.b16 %v439
    %v530 = vunpack.c.l.b16 %v440
    %v531 = vunpack.c.l.b16 %v441
    %v532 = vunpack.c.l.b16 %v442
    %v533 = vunpack.c.l.b16 %v443
    %v534 = vunpack.c.l.b16 %v444
    %v535 = vunpack.c.l.b16 %v445
    %v536 = vpack.c.b16 %v521, %v520
    %v537 = vpack.c.b16 %v523, %v522
    %v538 = vpack.c.b16 %v525, %v524
    %v539 = vpack.c.b16 %v527, %v526
    %v540 = vpack.c.b16 %v529, %v528
    %v541 = vpack.c.b16 %v531, %v530
    %v542 = vpack.c.b16 %v533, %v532
    %v543 = vpack.c.b16 %v535, %v534
    %552 = vmatpush.bf16.msra.mxu0 %v543
    %553 = vmatpush.bf16.msra.mxu0 %v542
    %554 = vmatpush.bf16.msra.mxu0 %v541
    %555 = vmatpush.bf16.msra.mxu0 %v540
    %556 = vmatpush.bf16.msra.mxu0 %v539
    %557 = vmatpush.bf16.msra.mxu0 %v538
    %558 = vmatpush.bf16.msra.mxu0 %v537
    %559 = vmatpush.bf16.msra.mxu0 %v536
    %560 = vmatmul.bf16.gmra.mxu0 %v486
    %v561 = vpop.f32.mrf.mxu0
    %v562 = vadd.f32 %v448, %v561
    %v563 = vpop.f32.mrf.mxu0
    %v564 = vadd.f32 %v448, %v563
    %565 = vmatmul.bf16.gmra.mxu0 %v487
    %v566 = vpop.f32.mrf.mxu0
    %v567 = vadd.f32 %v448, %v566
    %v568 = vpop.f32.mrf.mxu0
    %v569 = vadd.f32 %v448, %v568
    %570 = vmatmul.bf16.gmra.mxu0 %v488
    %v571 = vpop.f32.mrf.mxu0
    %v572 = vadd.f32 %v448, %v571
    %v573 = vpop.f32.mrf.mxu0
    %v574 = vadd.f32 %v448, %v573
    %575 = vmatmul.bf16.gmra.mxu0 %v489
    %v576 = vpop.f32.mrf.mxu0
    %v577 = vadd.f32 %v448, %v576
    %v578 = vpop.f32.mrf.mxu0
    %v579 = vadd.f32 %v448, %v578
    %580 = vmatmul.bf16.gmra.mxu0 %v490
    %v581 = vpop.f32.mrf.mxu0
    %v582 = vadd.f32 %v448, %v581
    %v583 = vpop.f32.mrf.mxu0
    %v584 = vadd.f32 %v448, %v583
    %585 = vmatmul.bf16.gmra.mxu0 %v491
    %v586 = vpop.f32.mrf.mxu0
    %v587 = vadd.f32 %v448, %v586
    %v588 = vpop.f32.mrf.mxu0
    %v589 = vadd.f32 %v448, %v588
    %590 = vmatmul.bf16.gmra.mxu0 %v492
    %v591 = vpop.f32.mrf.mxu0
    %v592 = vadd.f32 %v448, %v591
    %v593 = vpop.f32.mrf.mxu0
    %v594 = vadd.f32 %v448, %v593
    %595 = vmatmul.bf16.gmra.mxu0 %v493
    %v596 = vpop.f32.mrf.mxu0
    %v597 = vadd.f32 %v448, %v596
    %v598 = vpop.f32.mrf.mxu0
    %v599 = vadd.f32 %v448, %v598
    %600 = vmatmul.bf16.gmra.mxu0 %v494
    %v601 = vpop.f32.mrf.mxu0
    %v602 = vadd.f32 %v448, %v601
    %v603 = vpop.f32.mrf.mxu0
    %v604 = vadd.f32 %v448, %v603
    %605 = vdwg.mxu0
    %v606 = vpack.c.bf16 %v564, %v562
    %v607 = vpack.c.bf16 %v569, %v567
    %v608 = vpack.c.bf16 %v574, %v572
    %v609 = vpack.c.bf16 %v579, %v577
    %v610 = vpack.c.bf16 %v584, %v582
    %v611 = vpack.c.bf16 %v589, %v587
    %v612 = vpack.c.bf16 %v594, %v592
    %v613 = vpack.c.bf16 %v599, %v597
    %v614 = vpack.c.bf16 %v604, %v602
    %v615 = vld [vmem:[#allocation8] sm:$0xf]
    %v616 = vld [vmem:[#allocation8 + $0x4] sm:$0xf]
    %v617 = vld [vmem:[#allocation8 + $0x8] sm:$0xf]
    %v618 = vld [vmem:[#allocation8 + $0xc] sm:$0xf]
    %v619 = vld [vmem:[#allocation8 + $0x10] sm:$0xf]
    %v620 = vld [vmem:[#allocation8 + $0x14] sm:$0xf]
    %v621 = vld [vmem:[#allocation8 + $0x18] sm:$0xf]
    %v622 = vld [vmem:[#allocation8 + $0x1c] sm:$0xf]
    %v623 = vld [vmem:[#allocation8 + $0x20] sm:$0xf]
    %v624 = vld [vmem:[#allocation8 + $0x24] sm:$0xf]
    %v625 = vld [vmem:[#allocation8 + $0x28] sm:$0xf]
    %v626 = vld [vmem:[#allocation8 + $0x2c] sm:$0xf]
    %v627 = vld [vmem:[#allocation8 + $0x30] sm:$0xf]
    %v628 = vld [vmem:[#allocation8 + $0x34] sm:$0xf]
    %v629 = vld [vmem:[#allocation8 + $0x38] sm:$0xf]
    %v630 = vld [vmem:[#allocation8 + $0x3c] sm:$0xf]
    %v647 = vunpack.c.l.b16 %v615
    %v648 = vunpack.c.l.b16 %v616
    %v649 = vunpack.c.l.b16 %v617
    %v650 = vunpack.c.l.b16 %v618
    %v651 = vunpack.c.l.b16 %v619
    %v652 = vunpack.c.l.b16 %v620
    %v653 = vunpack.c.l.b16 %v621
    %v654 = vunpack.c.l.b16 %v622
    %v655 = vunpack.c.l.b16 %v623
    %v656 = vunpack.c.l.b16 %v624
    %v657 = vunpack.c.l.b16 %v625
    %v658 = vunpack.c.l.b16 %v626
    %v659 = vunpack.c.l.b16 %v627
    %v660 = vunpack.c.l.b16 %v628
    %v661 = vunpack.c.l.b16 %v629
    %v662 = vunpack.c.l.b16 %v630
    %v663 = vpack.c.b16 %v648, %v647
    %v664 = vpack.c.b16 %v650, %v649
    %v665 = vpack.c.b16 %v652, %v651
    %v666 = vpack.c.b16 %v654, %v653
    %v667 = vpack.c.b16 %v656, %v655
    %v668 = vpack.c.b16 %v658, %v657
    %v669 = vpack.c.b16 %v660, %v659
    %v670 = vpack.c.b16 %v662, %v661
    %679 = vmatpush.bf16.msra.mxu0 %v670
    %680 = vmatpush.bf16.msra.mxu0 %v669
    %681 = vmatpush.bf16.msra.mxu0 %v668
    %682 = vmatpush.bf16.msra.mxu0 %v667
    %683 = vmatpush.bf16.msra.mxu0 %v666
    %684 = vmatpush.bf16.msra.mxu0 %v665
    %685 = vmatpush.bf16.msra.mxu0 %v664
    %686 = vmatpush.bf16.msra.mxu0 %v663
    %687 = vmatmul.bf16.gmra.mxu0 %v606
    %v688 = vpop.f32.mrf.mxu0
    %v689 = vadd.f32 0.0, %v688
    %v690 = vpop.f32.mrf.mxu0
    %v691 = vadd.f32 0.0, %v690
    %692 = vmatmul.bf16.gmra.mxu0 %v607
    %v693 = vpop.f32.mrf.mxu0
    %v694 = vadd.f32 0.0, %v693
    %v695 = vpop.f32.mrf.mxu0
    %v696 = vadd.f32 0.0, %v695
    %697 = vmatmul.bf16.gmra.mxu0 %v608
    %v698 = vpop.f32.mrf.mxu0
    %v699 = vadd.f32 0.0, %v698
    %v700 = vpop.f32.mrf.mxu0
    %v701 = vadd.f32 0.0, %v700
    %702 = vmatmul.bf16.gmra.mxu0 %v609
    %v703 = vpop.f32.mrf.mxu0
    %v704 = vadd.f32 0.0, %v703
    %v705 = vpop.f32.mrf.mxu0
    %v706 = vadd.f32 0.0, %v705
    %707 = vmatmul.bf16.gmra.mxu0 %v610
    %v708 = vpop.f32.mrf.mxu0
    %v709 = vadd.f32 0.0, %v708
    %v710 = vpop.f32.mrf.mxu0
    %v711 = vadd.f32 0.0, %v710
    %712 = vmatmul.bf16.gmra.mxu0 %v611
    %v713 = vpop.f32.mrf.mxu0
    %v714 = vadd.f32 0.0, %v713
    %v715 = vpop.f32.mrf.mxu0
    %v716 = vadd.f32 0.0, %v715
    %717 = vmatmul.bf16.gmra.mxu0 %v612
    %v718 = vpop.f32.mrf.mxu0
    %v719 = vadd.f32 0.0, %v718
    %v720 = vpop.f32.mrf.mxu0
    %v721 = vadd.f32 0.0, %v720
    %722 = vmatmul.bf16.gmra.mxu0 %v613
    %v723 = vpop.f32.mrf.mxu0
    %v724 = vadd.f32 0.0, %v723
    %v725 = vpop.f32.mrf.mxu0
    %v726 = vadd.f32 0.0, %v725
    %727 = vmatmul.bf16.gmra.mxu0 %v614
    %v728 = vpop.f32.mrf.mxu0
    %v729 = vadd.f32 0.0, %v728
    %v730 = vpop.f32.mrf.mxu0
    %v731 = vadd.f32 0.0, %v730
    %732 = vdwg.mxu0
    %v733 = vpack.c.bf16 %v689, %v689
    %v734 = vpack.c.bf16 %v691, %v691
    %v735 = vpack.c.bf16 %v694, %v694
    %v736 = vpack.c.bf16 %v696, %v696
    %v737 = vpack.c.bf16 %v699, %v699
    %v738 = vpack.c.bf16 %v701, %v701
    %v739 = vpack.c.bf16 %v704, %v704
    %v740 = vpack.c.bf16 %v706, %v706
    %v741 = vpack.c.bf16 %v709, %v709
    %v742 = vpack.c.bf16 %v711, %v711
    %v743 = vpack.c.bf16 %v714, %v714
    %v744 = vpack.c.bf16 %v716, %v716
    %v745 = vpack.c.bf16 %v719, %v719
    %v746 = vpack.c.bf16 %v721, %v721
    %v747 = vpack.c.bf16 %v724, %v724
    %v748 = vpack.c.bf16 %v726, %v726
    %v749 = vpack.c.bf16 %v729, %v729
    %v750 = vpack.c.bf16 %v731, %v731
    %751 = vst [vmem:[#allocation10 + $0x78] sm:$0xf] %v733
    %752 = vst [vmem:[#allocation10 + $0x7c] sm:$0xf] %v734
    %753 = vst [vmem:[#allocation10 + $0x80] sm:$0xf] %v735
    %754 = vst [vmem:[#allocation10 + $0x84] sm:$0xf] %v736
    %755 = vst [vmem:[#allocation10 + $0x88] sm:$0xf] %v737
    %756 = vst [vmem:[#allocation10 + $0x8c] sm:$0xf] %v738
    %757 = vst [vmem:[#allocation10 + $0x90] sm:$0xf] %v739
    %758 = vst [vmem:[#allocation10 + $0x94] sm:$0xf] %v740
    %759 = vst [vmem:[#allocation10 + $0x98] sm:$0xf] %v741
    %760 = vst [vmem:[#allocation10 + $0x9c] sm:$0xf] %v742
    %761 = vst [vmem:[#allocation10 + $0xa0] sm:$0xf] %v743
    %762 = vst [vmem:[#allocation10 + $0xa4] sm:$0xf] %v744
    %763 = vst [vmem:[#allocation10 + $0xa8] sm:$0xf] %v745
    %764 = vst [vmem:[#allocation10 + $0xac] sm:$0xf] %v746
    %765 = vst [vmem:[#allocation10 + $0xb0] sm:$0xf] %v747
    %766 = vst [vmem:[#allocation10 + $0xb4] sm:$0xf] %v748
    %767 = vst [vmem:[#allocation10 + $0xb8] sm:$0xf] %v749
    %768 = vst [vmem:[#allocation10 + $0xbc] sm:$0xf] %v750
    // Predicated region
    $region38: #{tpu_custom_call.1} parent=1 // pred_check
      _
    $region39: #{tpu_custom_call.1} parent=1 // pred_check_branch
      %770 = sbr.rel (0) target = $region41
    $region40: #{tpu_custom_call.1} parent=1 // pred_region
      %772 = vsyncadd [#allocation4], 0
      %s773 = sshll.u32 [#allocation10], 4
      %s774 = int_to_ptr.vmem [resolvable:$true] %s773
      %s775 = sshll.u32 %s5, 4
      %s776 = int_to_ptr.hbm [resolvable:$true] %s775
      %781 = dma.vmem_to_hbm [thread:$0]  %s774, 3072, %s776, [#allocation4], 64, 64, 4
    $region41: #{tpu_custom_call.1} parent=1 // pred_fallthru
      _
    // Predicated region
    $region42: #{tpu_custom_call.1} parent=1 // pred_check
      _
    $region43: #{tpu_custom_call.1} parent=1 // pred_check_branch
      %783 = sbr.rel (0) target = $region45
    $region44: #{tpu_custom_call.1} parent=1 // pred_region
      %785 = dma.done [#allocation4], 3072
    $region45: #{tpu_custom_call.1} parent=1 // pred_fallthru
      _
    %786 = vsyncpa [#allocation3], 1
    %787 = vsyncpa [#allocation6], 1
    %788 = vsyncpa [#allocation9], 1
    %789 = vsyncpa [#allocation4], 1

</llo_original>
